<compile_context>
chip_gen: v7x
topology: tpu7x:2x2x1
jax: 0.10.0
libtpu: 0.0.40
codegen_flags: <defaults>
</compile_context>

<pallas_src>
import math

import jax
import jax.numpy as jnp
from jax import lax
from jax.experimental import pallas as pl
from jax.experimental.pallas import tpu as pltpu

_HIDDEN = 5            # layer1 output features
_LANES = 128           # lane width
_CHUNK_ROWS = 16       # rows per inner-loop step (2 vregs per live value)
_MAX_TILE_ROWS = 2048  # rows per grid step (2 MiB in + 1 MiB out per step)


def _mlp_kernel(x_ref, w1_ref, b1_ref, w2_ref, b2_ref, o_ref):
    # x_ref : (2, R, 128) f32 VMEM  -- x0 / x1 planes, R rows x 128 lanes
    # w1_ref: (5, 2) f32 SMEM  (pre-scaled by 1/sqrt(2))
    # b1_ref: (5,)   f32 SMEM  (pre-scaled by 1/sqrt(2))
    # w2_ref: (5,)   f32 SMEM  (pre-scaled by 0.5*sqrt(2))
    # b2_ref: (1,)   f32 SMEM
    # o_ref : (R, 128) f32 VMEM
    rows = o_ref.shape[0]

    # hoist the 16 weight/bias scalars out of the row-chunk loop (scalar unit)
    wa = [w1_ref[j, 0] for j in range(_HIDDEN)]
    wb = [w1_ref[j, 1] for j in range(_HIDDEN)]
    bb = [b1_ref[j] for j in range(_HIDDEN)]
    ww = [w2_ref[j] for j in range(_HIDDEN)]
    bias2 = b2_ref[0]

    @pl.loop(0, rows // _CHUNK_ROWS)
    def _(c):
        r0 = pl.multiple_of(c * _CHUNK_ROWS, _CHUNK_ROWS)
        x0 = x_ref[0, pl.ds(r0, _CHUNK_ROWS), :]   # (CHUNK, 128), sublane-dense
        x1 = x_ref[1, pl.ds(r0, _CHUNK_ROWS), :]
        acc = jnp.full_like(x0, bias2)
        # static unroll over the 5 hidden units: pure VALU FMAs + erf
        for j in range(_HIDDEN):
            # hs = (w1.x + b1) / sqrt(2): the 1/sqrt(2) is folded into SMEM scalars
            hs = x0 * wa[j] + (x1 * wb[j] + bb[j])
            # exact erf GELU:  w2 * gelu(h) == (0.5*sqrt(2)*w2) * hs * (1 + erf(hs))
            acc = acc + ww[j] * (hs * (1.0 + lax.erf(hs)))
        o_ref[pl.ds(r0, _CHUNK_ROWS), :] = acc.astype(o_ref.dtype)


def net_forward(x, w1, b1, w2, b2, *, max_tile_rows=_MAX_TILE_ROWS):
    """Fused Linear(2,5) -> GELU(erf) -> Linear(5,1).

    x: (B, 2) f32.  w1: (5, 2), b1: (5,), w2: (1, 5), b2: (1,)  (PyTorch layout).
    Returns (B, 1) f32.
    """
    assert max_tile_rows % _CHUNK_ROWS == 0
    B = x.shape[0]
    dtype = x.dtype
    inv_sqrt2 = 1.0 / math.sqrt(2.0)

    # Fold GELU constants into the 17 weight/bias scalars (tiny one-off ops).
    w1s = (w1 * inv_sqrt2).astype(jnp.float32)
    b1s = (b1 * inv_sqrt2).astype(jnp.float32)
    w2s = (w2.reshape(-1) * (0.5 * math.sqrt(2.0))).astype(jnp.float32)
    b2s = b2.astype(jnp.float32)

    # Sublane+lane dense layout: (B, 2) -> (2, rows, 128), rows a tile multiple.
    rows_needed = -(-B // _LANES)
    tile_rows = min(max_tile_rows, -(-rows_needed // _CHUNK_ROWS) * _CHUNK_ROWS)
    total_rows = -(-rows_needed // tile_rows) * tile_rows
    Bp = total_rows * _LANES

    # TODO(synk): the (B,2)->(2,B) transpose is pure layout plumbing; accept
    # feature-major input from the producer to drop this extra HBM pass.
    xt = jnp.transpose(x)                              # (2, B)
    if Bp != B:
        xt = jnp.pad(xt, ((0, 0), (0, Bp - B)))
    xt = xt.reshape(2, total_rows, _LANES)             # contiguous / free

    smem = pl.BlockSpec(memory_space=pltpu.MemorySpace.SMEM)

    out = pl.pallas_call(
        _mlp_kernel,
        out_shape=jax.ShapeDtypeStruct((total_rows, _LANES), dtype),
        grid=(total_rows // tile_rows,),
        in_specs=[
            pl.BlockSpec((2, tile_rows, _LANES), lambda i: (0, i, 0)),  # activations
            smem,   # w1 (5, 2)  pre-scaled
            smem,   # b1 (5,)    pre-scaled
            smem,   # w2 (5,)    pre-scaled
            smem,   # b2 (1,)
        ],
        out_specs=pl.BlockSpec((tile_rows, _LANES), lambda i: (i, 0)),
        compiler_params=pltpu.CompilerParams(
            dimension_semantics=("parallel",),
        ),
    )(xt, w1s, b1s, w2s, b2s)

    # drop padded tail, back to PyTorch's (B, 1)
    return out.reshape(Bp)[:B].reshape(B, 1)


def _reference(x, w1, b1, w2, b2):
    h = x @ w1.T + b1
    h = 0.5 * h * (1.0 + lax.erf(h * (1.0 / math.sqrt(2.0))))
    return h @ w2.T + b2


def init_params(key):
    """Deterministic init mimicking nn.Linear defaults (uniform +-1/sqrt(fan_in))."""
    k1, k2, k3, k4 = jax.random.split(key, 4)
    bound1 = 1.0 / math.sqrt(2.0)
    bound2 = 1.0 / math.sqrt(5.0)
    w1 = jax.random.uniform(k1, (5, 2), jnp.float32, -bound1, bound1)
    b1 = jax.random.uniform(k2, (5,), jnp.float32, -bound1, bound1)
    w2 = jax.random.uniform(k3, (1, 5), jnp.float32, -bound2, bound2)
    b2 = jax.random.uniform(k4, (1,), jnp.float32, -bound2, bound2)
    return w1, b1, w2, b2


if __name__ == "__main__":
    key = jax.random.PRNGKey(0)
    k_x, k_p = jax.random.split(key)
    w1, b1, w2, b2 = init_params(k_p)

    # (B, max_tile_rows): small demo batch, a pad/slice-exercising batch, and a
    # deliberately small tile cap so the multi-step grid path is exercised too.
    for B, mtr in ((8, _MAX_TILE_ROWS), (200, _MAX_TILE_ROWS), (5000, 16)):
        kx = jax.random.fold_in(k_x, B)
        x = jax.random.normal(kx, (B, 2), jnp.float32)

        out = jax.block_until_ready(
            net_forward(x, w1, b1, w2, b2, max_tile_rows=mtr))
        ref = _reference(x, w1, b1, w2, b2)

        assert out.shape == (B, 1)
        assert jnp.allclose(out, ref, atol=1e-5, rtol=1e-5), (
            f"mismatch at B={B}: max abs err {jnp.max(jnp.abs(out - ref))}")

    print("KERNEL_OK")
</pallas_src>

<mosaic_0001>
module attributes {stable_mosaic.version = 11 : i64} {
  func.func @_mlp_kernel(%arg0: i32, %arg1: memref<2x16x128xf32, #tpu.memory_space<vmem>>, %arg2: memref<5x2xf32, #tpu.memory_space<smem>>, %arg3: memref<5xf32, #tpu.memory_space<smem>>, %arg4: memref<5xf32, #tpu.memory_space<smem>>, %arg5: memref<1xf32, #tpu.memory_space<smem>>, %arg6: memref<16x128xf32, #tpu.memory_space<vmem>>) attributes {dimension_semantics = [#tpu.dimension_semantics<parallel>], iteration_bounds = array<i64: 1>, scalar_prefetch = 0 : i64, scratch_operands = 0 : i64, tpu.core_type = #tpu.core_type<tc>, window_params = [{transform_indices = @transform_0, window_bounds = array<i64: 2, 16, 128>}, {transform_indices = @transform_1, window_bounds = array<i64: 5, 2>}, {transform_indices = @transform_2, window_bounds = array<i64: 5>}, {transform_indices = @transform_3, window_bounds = array<i64: 5>}, {transform_indices = @transform_4, window_bounds = array<i64: 1>}, {transform_indices = @transform_5, window_bounds = array<i64: 16, 128>}]} {
    %c0 = arith.constant 0 : index
    %c0_0 = arith.constant 0 : index
    %0 = memref.load %arg2[%c0, %c0_0] : memref<5x2xf32, #tpu.memory_space<smem>>
    %c1 = arith.constant 1 : index
    %c0_1 = arith.constant 0 : index
    %1 = memref.load %arg2[%c1, %c0_1] : memref<5x2xf32, #tpu.memory_space<smem>>
    %c2 = arith.constant 2 : index
    %c0_2 = arith.constant 0 : index
    %2 = memref.load %arg2[%c2, %c0_2] : memref<5x2xf32, #tpu.memory_space<smem>>
    %c3 = arith.constant 3 : index
    %c0_3 = arith.constant 0 : index
    %3 = memref.load %arg2[%c3, %c0_3] : memref<5x2xf32, #tpu.memory_space<smem>>
    %c4 = arith.constant 4 : index
    %c0_4 = arith.constant 0 : index
    %4 = memref.load %arg2[%c4, %c0_4] : memref<5x2xf32, #tpu.memory_space<smem>>
    %c0_5 = arith.constant 0 : index
    %c1_6 = arith.constant 1 : index
    %5 = memref.load %arg2[%c0_5, %c1_6] : memref<5x2xf32, #tpu.memory_space<smem>>
    %c1_7 = arith.constant 1 : index
    %c1_8 = arith.constant 1 : index
    %6 = memref.load %arg2[%c1_7, %c1_8] : memref<5x2xf32, #tpu.memory_space<smem>>
    %c2_9 = arith.constant 2 : index
    %c1_10 = arith.constant 1 : index
    %7 = memref.load %arg2[%c2_9, %c1_10] : memref<5x2xf32, #tpu.memory_space<smem>>
    %c3_11 = arith.constant 3 : index
    %c1_12 = arith.constant 1 : index
    %8 = memref.load %arg2[%c3_11, %c1_12] : memref<5x2xf32, #tpu.memory_space<smem>>
    %c4_13 = arith.constant 4 : index
    %c1_14 = arith.constant 1 : index
    %9 = memref.load %arg2[%c4_13, %c1_14] : memref<5x2xf32, #tpu.memory_space<smem>>
    %c0_15 = arith.constant 0 : index
    %10 = memref.load %arg3[%c0_15] : memref<5xf32, #tpu.memory_space<smem>>
    %c1_16 = arith.constant 1 : index
    %11 = memref.load %arg3[%c1_16] : memref<5xf32, #tpu.memory_space<smem>>
    %c2_17 = arith.constant 2 : index
    %12 = memref.load %arg3[%c2_17] : memref<5xf32, #tpu.memory_space<smem>>
    %c3_18 = arith.constant 3 : index
    %13 = memref.load %arg3[%c3_18] : memref<5xf32, #tpu.memory_space<smem>>
    %c4_19 = arith.constant 4 : index
    %14 = memref.load %arg3[%c4_19] : memref<5xf32, #tpu.memory_space<smem>>
    %c0_20 = arith.constant 0 : index
    %15 = memref.load %arg4[%c0_20] : memref<5xf32, #tpu.memory_space<smem>>
    %c1_21 = arith.constant 1 : index
    %16 = memref.load %arg4[%c1_21] : memref<5xf32, #tpu.memory_space<smem>>
    %c2_22 = arith.constant 2 : index
    %17 = memref.load %arg4[%c2_22] : memref<5xf32, #tpu.memory_space<smem>>
    %c3_23 = arith.constant 3 : index
    %18 = memref.load %arg4[%c3_23] : memref<5xf32, #tpu.memory_space<smem>>
    %c4_24 = arith.constant 4 : index
    %19 = memref.load %arg4[%c4_24] : memref<5xf32, #tpu.memory_space<smem>>
    %c0_25 = arith.constant 0 : index
    %20 = memref.load %arg5[%c0_25] : memref<1xf32, #tpu.memory_space<smem>>
    %c0_i32 = arith.constant 0 : i32
    %c1_i32 = arith.constant 1 : i32
    %21 = arith.muli %c0_i32, %c1_i32 : i32
    %c0_i32_26 = arith.constant 0 : i32
    %22 = arith.addi %c0_i32_26, %21 : i32
    %c16_i32 = arith.constant 16 : i32
    %23 = arith.muli %22, %c16_i32 : i32
    %24 = tpu.assume_multiple %23, 16 : i32
    %c0_27 = arith.constant 0 : index
    %25 = arith.index_cast %24 : i32 to index
    %c0_28 = arith.constant 0 : index
    %26 = vector.load %arg1[%c0_27, %25, %c0_28] : memref<2x16x128xf32, #tpu.memory_space<vmem>>, vector<1x16x128xf32>
    %27 = vector.shape_cast %26 : vector<1x16x128xf32> to vector<16x128xf32>
    %c1_29 = arith.constant 1 : index
    %28 = arith.index_cast %24 : i32 to index
    %c0_30 = arith.constant 0 : index
    %29 = vector.load %arg1[%c1_29, %28, %c0_30] : memref<2x16x128xf32, #tpu.memory_space<vmem>>, vector<1x16x128xf32>
    %30 = vector.shape_cast %29 : vector<1x16x128xf32> to vector<16x128xf32>
    %31 = vector.broadcast %20 : f32 to vector<16x128xf32>
    %32 = vector.broadcast %0 : f32 to vector<16x128xf32>
    %33 = arith.mulf %27, %32 : vector<16x128xf32>
    %34 = vector.broadcast %5 : f32 to vector<16x128xf32>
    %35 = arith.mulf %30, %34 : vector<16x128xf32>
    %36 = vector.broadcast %10 : f32 to vector<16x128xf32>
    %37 = arith.addf %35, %36 : vector<16x128xf32>
    %38 = arith.addf %33, %37 : vector<16x128xf32>
    %39 = math.erf %38 : vector<16x128xf32>
    %cst = arith.constant 1.000000e+00 : f32
    %40 = vector.broadcast %cst : f32 to vector<16x128xf32>
    %41 = arith.addf %40, %39 : vector<16x128xf32>
    %42 = arith.mulf %38, %41 : vector<16x128xf32>
    %43 = vector.broadcast %15 : f32 to vector<16x128xf32>
    %44 = arith.mulf %43, %42 : vector<16x128xf32>
    %45 = arith.addf %31, %44 : vector<16x128xf32>
    %46 = vector.broadcast %1 : f32 to vector<16x128xf32>
    %47 = arith.mulf %27, %46 : vector<16x128xf32>
    %48 = vector.broadcast %6 : f32 to vector<16x128xf32>
    %49 = arith.mulf %30, %48 : vector<16x128xf32>
    %50 = vector.broadcast %11 : f32 to vector<16x128xf32>
    %51 = arith.addf %49, %50 : vector<16x128xf32>
    %52 = arith.addf %47, %51 : vector<16x128xf32>
    %53 = math.erf %52 : vector<16x128xf32>
    %cst_31 = arith.constant 1.000000e+00 : f32
    %54 = vector.broadcast %cst_31 : f32 to vector<16x128xf32>
    %55 = arith.addf %54, %53 : vector<16x128xf32>
    %56 = arith.mulf %52, %55 : vector<16x128xf32>
    %57 = vector.broadcast %16 : f32 to vector<16x128xf32>
    %58 = arith.mulf %57, %56 : vector<16x128xf32>
    %59 = arith.addf %45, %58 : vector<16x128xf32>
    %60 = vector.broadcast %2 : f32 to vector<16x128xf32>
    %61 = arith.mulf %27, %60 : vector<16x128xf32>
    %62 = vector.broadcast %7 : f32 to vector<16x128xf32>
    %63 = arith.mulf %30, %62 : vector<16x128xf32>
    %64 = vector.broadcast %12 : f32 to vector<16x128xf32>
    %65 = arith.addf %63, %64 : vector<16x128xf32>
    %66 = arith.addf %61, %65 : vector<16x128xf32>
    %67 = math.erf %66 : vector<16x128xf32>
    %cst_32 = arith.constant 1.000000e+00 : f32
    %68 = vector.broadcast %cst_32 : f32 to vector<16x128xf32>
    %69 = arith.addf %68, %67 : vector<16x128xf32>
    %70 = arith.mulf %66, %69 : vector<16x128xf32>
    %71 = vector.broadcast %17 : f32 to vector<16x128xf32>
    %72 = arith.mulf %71, %70 : vector<16x128xf32>
    %73 = arith.addf %59, %72 : vector<16x128xf32>
    %74 = vector.broadcast %3 : f32 to vector<16x128xf32>
    %75 = arith.mulf %27, %74 : vector<16x128xf32>
    %76 = vector.broadcast %8 : f32 to vector<16x128xf32>
    %77 = arith.mulf %30, %76 : vector<16x128xf32>
    %78 = vector.broadcast %13 : f32 to vector<16x128xf32>
    %79 = arith.addf %77, %78 : vector<16x128xf32>
    %80 = arith.addf %75, %79 : vector<16x128xf32>
    %81 = math.erf %80 : vector<16x128xf32>
    %cst_33 = arith.constant 1.000000e+00 : f32
    %82 = vector.broadcast %cst_33 : f32 to vector<16x128xf32>
    %83 = arith.addf %82, %81 : vector<16x128xf32>
    %84 = arith.mulf %80, %83 : vector<16x128xf32>
    %85 = vector.broadcast %18 : f32 to vector<16x128xf32>
    %86 = arith.mulf %85, %84 : vector<16x128xf32>
    %87 = arith.addf %73, %86 : vector<16x128xf32>
    %88 = vector.broadcast %4 : f32 to vector<16x128xf32>
    %89 = arith.mulf %27, %88 : vector<16x128xf32>
    %90 = vector.broadcast %9 : f32 to vector<16x128xf32>
    %91 = arith.mulf %30, %90 : vector<16x128xf32>
    %92 = vector.broadcast %14 : f32 to vector<16x128xf32>
    %93 = arith.addf %91, %92 : vector<16x128xf32>
    %94 = arith.addf %89, %93 : vector<16x128xf32>
    %95 = math.erf %94 : vector<16x128xf32>
    %cst_34 = arith.constant 1.000000e+00 : f32
    %96 = vector.broadcast %cst_34 : f32 to vector<16x128xf32>
    %97 = arith.addf %96, %95 : vector<16x128xf32>
    %98 = arith.mulf %94, %97 : vector<16x128xf32>
    %99 = vector.broadcast %19 : f32 to vector<16x128xf32>
    %100 = arith.mulf %99, %98 : vector<16x128xf32>
    %101 = arith.addf %87, %100 : vector<16x128xf32>
    %102 = arith.index_cast %24 : i32 to index
    %c0_35 = arith.constant 0 : index
    %103 = vector.load %arg6[%102, %c0_35] : memref<16x128xf32, #tpu.memory_space<vmem>>, vector<16x128xf32>
    tpu.vector_store %arg6[%102, %c0_35], %101 {strides = array<i32>} : memref<16x128xf32, #tpu.memory_space<vmem>>, vector<16x128xf32>,
    %c1_i32_36 = arith.constant 1 : i32
    return
  }
  func.func @transform_0(%arg0: i32) -> (i32, i32, i32) {
    %c0_i32 = arith.constant 0 : i32
    %c0_i32_0 = arith.constant 0 : i32
    %c0_i32_1 = arith.constant 0 : i32
    return %c0_i32, %arg0, %c0_i32_0 : i32, i32, i32
  }
  func.func @transform_1(%arg0: i32) -> (i32, i32) {
    %c0_i32 = arith.constant 0 : i32
    %c0_i32_0 = arith.constant 0 : i32
    %c0_i32_1 = arith.constant 0 : i32
    return %c0_i32, %c0_i32_0 : i32, i32
  }
  func.func @transform_2(%arg0: i32) -> i32 {
    %c0_i32 = arith.constant 0 : i32
    %c0_i32_0 = arith.constant 0 : i32
    return %c0_i32 : i32
  }
  func.func @transform_3(%arg0: i32) -> i32 {
    %c0_i32 = arith.constant 0 : i32
    %c0_i32_0 = arith.constant 0 : i32
    return %c0_i32 : i32
  }
  func.func @transform_4(%arg0: i32) -> i32 {
    %c0_i32 = arith.constant 0 : i32
    %c0_i32_0 = arith.constant 0 : i32
    return %c0_i32 : i32
  }
  func.func @transform_5(%arg0: i32) -> (i32, i32) {
    %c0_i32 = arith.constant 0 : i32
    %c0_i32_0 = arith.constant 0 : i32
    return %arg0, %c0_i32 : i32, i32
  }
}

</mosaic_0001>

<llo_original>
// kernel: tpu_custom_call.1
$region0: #{tpu_custom_call.1}
  #allocation0 [shape = 'u32[]', space=smem, size = 0x4, offset = 0x4, fixed_abs, tag = 'smem constant byte address 0x4 - core index']
  #allocation1 [shape = 'u32[144,128]{1,0:T(1,128)}', space=vmem, size = 0x12000, scoped, tag = 'internal scratch']
  #allocation2 [shape = 'f32[1]{0:T(128)S(6)}', space=smem, size = 0x200, scoped, tag = 'scoped memory for tpu_custom_call.1']
  %s0 = inlined_call_operand.hbm [shape: f32[2,16,128], index: 0, kind: input, shape index: {}]
  %s1 = inlined_call_operand.vmem [shape: f32[5,2], index: 1, kind: input, shape index: {}]
  %s2 = inlined_call_operand.vmem [shape: f32[5], index: 2, kind: input, shape index: {}]
  %s3 = inlined_call_operand.vmem [shape: f32[5], index: 3, kind: input, shape index: {}]
  %s4 = inlined_call_operand.<no memory space> [shape: f32[1], index: 4, kind: input, shape index: {}]
  %s5 = inlined_call_operand.hbm [shape: f32[16,128], index: 5, kind: output, shape index: {}]
  %s6 = sld [smem:[#allocation0]]
  $region46: #{tpu_custom_call.1} parent=0
    _
  %s8 = ssub.s32 1, %s6
  %s9 = scalar_select 0, %s8, %s6
  %10 = sst [smem:[#allocation2]] %s4
  $region1: #{tpu_custom_call.1} parent=0
    #allocation3 [shape = 'u8[16384]{0}', space=vmem, size = 0x4000, scoped, tag = 'input window, operand 0, single buffered']
    #allocation4 [shape = 's32[1]{0}', space=sflag, size = 0x4, scoped, tag = 'scoped memory for tpu_custom_call.1']
    #allocation5 [shape = 's32[1]{0}', space=sflag, size = 0x4, scoped, tag = 'scoped memory for tpu_custom_call.1']
    #allocation6 [shape = 's32[1]{0}', space=sflag, size = 0x4, scoped, tag = 'scoped memory for tpu_custom_call.1']
    #allocation7 [shape = 'u8[4096]{0}', space=smem, size = 0x1000, scoped, tag = 'input window, operand 1, single buffered']
    #allocation8 [shape = 'u8[512]{0}', space=smem, size = 0x200, scoped, tag = 'input window, operand 2, single buffered']
    #allocation9 [shape = 's32[1]{0}', space=sflag, size = 0x4, scoped, tag = 'scoped memory for tpu_custom_call.1']
    #allocation10 [shape = 'u8[512]{0}', space=smem, size = 0x200, scoped, tag = 'input window, operand 3, single buffered']
    #allocation11 [shape = 'u8[8192]{0}', space=vmem, size = 0x2000, scoped, tag = 'output window, operand 0, single buffered']
    %11 = vsyncpa [#allocation4], 0
    %12 = vsyncpa [#allocation6], 0
    %13 = vsyncpa [#allocation9], 0
    %14 = vsyncpa [#allocation5], 0
    // Predicated region
    $region2: #{tpu_custom_call.1} parent=1 // pred_check
      _
    $region3: #{tpu_custom_call.1} parent=1 // pred_check_branch
      %16 = sbr.rel (0) target = $region5
    $region4: #{tpu_custom_call.1} parent=1 // pred_region
      %s18 = ssub.s32 512, 512
      %19 = vsyncadd [#allocation4], %s18
      %s20 = sshll.u32 [#allocation3], 4
      %s21 = int_to_ptr.vmem [resolvable:$true] %s20
      %26 = dma.hbm_to_vmem [thread:$0]  %s0, 512, %s21, [#allocation4], 128, 128, 8
    $region5: #{tpu_custom_call.1} parent=1 // pred_fallthru
      _
    // Predicated region
    $region6: #{tpu_custom_call.1} parent=1 // pred_check
      _
    $region7: #{tpu_custom_call.1} parent=1 // pred_check_branch
      %28 = sbr.rel (0) target = $region9
    $region8: #{tpu_custom_call.1} parent=1 // pred_region
      %s30 = ssub.s32 128, 128
      %31 = vsyncadd [#allocation6], %s30
      %s33 = sshll.u32 %s1, 4
      %s34 = int_to_ptr.vmem [resolvable:$true] %s33
      %36 = dma.vmem_to_smem %s34, 128, [#allocation7], [#allocation6]
    $region9: #{tpu_custom_call.1} parent=1 // pred_fallthru
      _
    // Predicated region
    $region10: #{tpu_custom_call.1} parent=1 // pred_check
      _
    $region11: #{tpu_custom_call.1} parent=1 // pred_check_branch
      %38 = sbr.rel (0) target = $region13
    $region12: #{tpu_custom_call.1} parent=1 // pred_region
      %s40 = ssub.s32 16, 16
      %41 = vsyncadd [#allocation9], %s40
      %s43 = sshll.u32 %s2, 4
      %s44 = int_to_ptr.vmem [resolvable:$true] %s43
      %46 = dma.vmem_to_smem %s44, 16, [#allocation8], [#allocation9]
    $region13: #{tpu_custom_call.1} parent=1 // pred_fallthru
      _
    // Predicated region
    $region14: #{tpu_custom_call.1} parent=1 // pred_check
      _
    $region15: #{tpu_custom_call.1} parent=1 // pred_check_branch
      %48 = sbr.rel (0) target = $region17
    $region16: #{tpu_custom_call.1} parent=1 // pred_region
      %s50 = ssub.s32 16, 16
      %51 = vsyncadd [#allocation9], %s50
      %s53 = sshll.u32 %s3, 4
      %s54 = int_to_ptr.vmem [resolvable:$true] %s53
      %56 = dma.vmem_to_smem %s54, 16, [#allocation10], [#allocation9]
    $region17: #{tpu_custom_call.1} parent=1 // pred_fallthru
      _
    // Predicated region
    $region18: #{tpu_custom_call.1} parent=1 // pred_check
      _
    $region19: #{tpu_custom_call.1} parent=1 // pred_check_branch
      %58 = sbr.rel (0) target = $region21
    $region20: #{tpu_custom_call.1} parent=1 // pred_region
      _
    $region21: #{tpu_custom_call.1} parent=1 // pred_fallthru
      _
    // Predicated region
    $region22: #{tpu_custom_call.1} parent=1 // pred_check
      _
    $region23: #{tpu_custom_call.1} parent=1 // pred_check_branch
      %60 = sbr.rel (0) target = $region25
    $region24: #{tpu_custom_call.1} parent=1 // pred_region
      %61 = dma.done [#allocation4], 512
    $region25: #{tpu_custom_call.1} parent=1 // pred_fallthru
      _
    // Predicated region
    $region26: #{tpu_custom_call.1} parent=1 // pred_check
      _
    $region27: #{tpu_custom_call.1} parent=1 // pred_check_branch
      %63 = sbr.rel (0) target = $region29
    $region28: #{tpu_custom_call.1} parent=1 // pred_region
      %64 = dma.done [#allocation6], 128
    $region29: #{tpu_custom_call.1} parent=1 // pred_fallthru
      _
    // Predicated region
    $region30: #{tpu_custom_call.1} parent=1 // pred_check
      _
    $region31: #{tpu_custom_call.1} parent=1 // pred_check_branch
      %66 = sbr.rel (0) target = $region33
    $region32: #{tpu_custom_call.1} parent=1 // pred_region
      %67 = dma.done [#allocation9], 16
    $region33: #{tpu_custom_call.1} parent=1 // pred_fallthru
      _
    // Predicated region
    $region34: #{tpu_custom_call.1} parent=1 // pred_check
      _
    $region35: #{tpu_custom_call.1} parent=1 // pred_check_branch
      %69 = sbr.rel (0) target = $region37
    $region36: #{tpu_custom_call.1} parent=1 // pred_region
      %70 = dma.done [#allocation9], 16
    $region37: #{tpu_custom_call.1} parent=1 // pred_fallthru
      _
    %71 = sfence
    %s72 = sld [smem:[#allocation7]]
    %s73 = sld [smem:[#allocation7 + $0x80]]
    %s74 = sld [smem:[#allocation7 + $0x100]]
    %s75 = sld [smem:[#allocation7 + $0x180]]
    %s76 = sld [smem:[#allocation7 + $0x200]]
    %s77 = sld [smem:[#allocation7 + $0x1]]
    %s78 = sld [smem:[#allocation7 + $0x81]]
    %s79 = sld [smem:[#allocation7 + $0x101]]
    %s80 = sld [smem:[#allocation7 + $0x181]]
    %s81 = sld [smem:[#allocation7 + $0x201]]
    %s82 = sld [smem:[#allocation8]]
    %s83 = sld [smem:[#allocation8 + $0x1]]
    %s84 = sld [smem:[#allocation8 + $0x2]]
    %s85 = sld [smem:[#allocation8 + $0x3]]
    %s86 = sld [smem:[#allocation8 + $0x4]]
    %s87 = sld [smem:[#allocation10]]
    %s88 = sld [smem:[#allocation10 + $0x1]]
    %s89 = sld [smem:[#allocation10 + $0x2]]
    %s90 = sld [smem:[#allocation10 + $0x3]]
    %s91 = sld [smem:[#allocation10 + $0x4]]
    %s92 = sld [smem:[#allocation2]]
    %v93 = vld [vmem:[#allocation3] sm:$0xff]
    %v94 = vld [vmem:[#allocation3 + $0x8] sm:$0xff]
    %s95 = sadd.s32 0, 16
    %s96 = scalar_lea.vmem [#allocation3], %s95
    %v97 = vld [vmem:[%s96] sm:$0xff]
    %v98 = vld [vmem:[%s96 + $0x8] sm:$0xff]
    %v99 = vstv %s92
    %v100 = vstv %s72
    %v101 = vmul.f32 %v93, %v100
    %v102 = vmul.f32 %v94, %v100
    %v103 = vstv %s77
    %v104 = vmul.f32 %v97, %v103
    %v105 = vmul.f32 %v98, %v103
    %v106 = vstv %s82
    %v107 = vadd.f32 %v104, %v106
    %v108 = vadd.f32 %v105, %v106
    %v109 = vadd.f32 %v101, %v107
    %v110 = vadd.f32 %v102, %v108
    %v111 = verf.f32.pop %v109
    %v112 = verf.f32.pop %v110
    %v113 = vadd.f32 %v111, 1.0
    %v114 = vadd.f32 %v112, 1.0
    %v115 = vmul.f32 %v109, %v113
    %v116 = vmul.f32 %v110, %v114
    %v117 = vstv %s87
    %v118 = vmul.f32 %v117, %v115
    %v119 = vmul.f32 %v117, %v116
    %v120 = vadd.f32 %v99, %v118
    %v121 = vadd.f32 %v99, %v119
    %v122 = vstv %s73
    %v123 = vmul.f32 %v93, %v122
    %v124 = vmul.f32 %v94, %v122
    %v125 = vstv %s78
    %v126 = vmul.f32 %v97, %v125
    %v127 = vmul.f32 %v98, %v125
    %v128 = vstv %s83
    %v129 = vadd.f32 %v126, %v128
    %v130 = vadd.f32 %v127, %v128
    %v131 = vadd.f32 %v123, %v129
    %v132 = vadd.f32 %v124, %v130
    %v133 = verf.f32.pop %v131
    %v134 = verf.f32.pop %v132
    %v135 = vadd.f32 %v133, 1.0
    %v136 = vadd.f32 %v134, 1.0
    %v137 = vmul.f32 %v131, %v135
    %v138 = vmul.f32 %v132, %v136
    %v139 = vstv %s88
    %v140 = vmul.f32 %v139, %v137
    %v141 = vmul.f32 %v139, %v138
    %v142 = vadd.f32 %v120, %v140
    %v143 = vadd.f32 %v121, %v141
    %v144 = vstv %s74
    %v145 = vmul.f32 %v93, %v144
    %v146 = vmul.f32 %v94, %v144
    %v147 = vstv %s79
    %v148 = vmul.f32 %v97, %v147
    %v149 = vmul.f32 %v98, %v147
    %v150 = vstv %s84
    %v151 = vadd.f32 %v148, %v150
    %v152 = vadd.f32 %v149, %v150
    %v153 = vadd.f32 %v145, %v151
    %v154 = vadd.f32 %v146, %v152
    %v155 = verf.f32.pop %v153
    %v156 = verf.f32.pop %v154
    %v157 = vadd.f32 %v155, 1.0
    %v158 = vadd.f32 %v156, 1.0
    %v159 = vmul.f32 %v153, %v157
    %v160 = vmul.f32 %v154, %v158
    %v161 = vstv %s89
    %v162 = vmul.f32 %v161, %v159
    %v163 = vmul.f32 %v161, %v160
    %v164 = vadd.f32 %v142, %v162
    %v165 = vadd.f32 %v143, %v163
    %v166 = vstv %s75
    %v167 = vmul.f32 %v93, %v166
    %v168 = vmul.f32 %v94, %v166
    %v169 = vstv %s80
    %v170 = vmul.f32 %v97, %v169
    %v171 = vmul.f32 %v98, %v169
    %v172 = vstv %s85
    %v173 = vadd.f32 %v170, %v172
    %v174 = vadd.f32 %v171, %v172
    %v175 = vadd.f32 %v167, %v173
    %v176 = vadd.f32 %v168, %v174
    %v177 = verf.f32.pop %v175
    %v178 = verf.f32.pop %v176
    %v179 = vadd.f32 %v177, 1.0
    %v180 = vadd.f32 %v178, 1.0
    %v181 = vmul.f32 %v175, %v179
    %v182 = vmul.f32 %v176, %v180
    %v183 = vstv %s90
    %v184 = vmul.f32 %v183, %v181
    %v185 = vmul.f32 %v183, %v182
    %v186 = vadd.f32 %v164, %v184
    %v187 = vadd.f32 %v165, %v185
    %v188 = vstv %s76
    %v189 = vmul.f32 %v93, %v188
    %v190 = vmul.f32 %v94, %v188
    %v191 = vstv %s81
    %v192 = vmul.f32 %v97, %v191
    %v193 = vmul.f32 %v98, %v191
    %v194 = vstv %s86
    %v195 = vadd.f32 %v192, %v194
    %v196 = vadd.f32 %v193, %v194
    %v197 = vadd.f32 %v189, %v195
    %v198 = vadd.f32 %v190, %v196
    %v199 = verf.f32.pop %v197
    %v200 = verf.f32.pop %v198
    %v201 = vadd.f32 %v199, 1.0
    %v202 = vadd.f32 %v200, 1.0
    %v203 = vmul.f32 %v197, %v201
    %v204 = vmul.f32 %v198, %v202
    %v205 = vstv %s91
    %v206 = vmul.f32 %v205, %v203
    %v207 = vmul.f32 %v205, %v204
    %v208 = vadd.f32 %v186, %v206
    %v209 = vadd.f32 %v187, %v207
    %210 = vst [vmem:[#allocation11] sm:$0xff] %v208
    %211 = vst [vmem:[#allocation11 + $0x8] sm:$0xff] %v209
    // Predicated region
    $region38: #{tpu_custom_call.1} parent=1 // pred_check
      _
    $region39: #{tpu_custom_call.1} parent=1 // pred_check_branch
      %213 = sbr.rel (0) target = $region41
    $region40: #{tpu_custom_call.1} parent=1 // pred_region
      %s215 = ssub.s32 256, 256
      %216 = vsyncadd [#allocation5], %s215
      %s217 = sshll.u32 [#allocation11], 4
      %s218 = int_to_ptr.vmem [resolvable:$true] %s217
      %223 = dma.vmem_to_hbm [thread:$0]  %s218, 256, %s5, [#allocation5], 128, 128, 8
    $region41: #{tpu_custom_call.1} parent=1 // pred_fallthru
      _
    // Predicated region
    $region42: #{tpu_custom_call.1} parent=1 // pred_check
      _
    $region43: #{tpu_custom_call.1} parent=1 // pred_check_branch
      %225 = sbr.rel (0) target = $region45
    $region44: #{tpu_custom_call.1} parent=1 // pred_region
      %226 = dma.done [#allocation5], 256
    $region45: #{tpu_custom_call.1} parent=1 // pred_fallthru
      _
    %227 = vsyncpa [#allocation4], 1
    %228 = vsyncpa [#allocation5], 1
    %229 = vsyncpa [#allocation6], 1
    %230 = vsyncpa [#allocation9], 1

</llo_original>
